<compile_context>
chip_gen: v7x
topology: tpu7x:2x2x1
jax: 0.10.0
libtpu: 0.0.40
codegen_flags: <defaults>
</compile_context>

<pallas_src>
import math

import jax
import jax.numpy as jnp
from jax.experimental import pallas as pl
from jax.experimental.pallas import tpu as pltpu


def _round_up(n, m):
    return ((n + m - 1) // m) * m


def _subject_layers_kernel(subjects_ref, x_ref, w_ref, o_ref):
    # x_ref: (tT, Cp), w_ref: (Cp, Dp), o_ref: (tT, Dp)
    del subjects_ref  # only consumed by the index_maps
    o_ref[...] = jnp.dot(
        x_ref[...], w_ref[...], preferred_element_type=jnp.float32
    ).astype(o_ref.dtype)


def subject_layers(x, subjects, weights, *, t_tile=512, compute_dtype=None):
    """Per-subject linear mixing of channels.

    x        : (B, T, C) float
    subjects : (B,) int, values in [0, n_subjects)
    weights  : (n_subjects, C, D) float
    returns  : (B, T, D) in x.dtype
    """
    B, T, C = x.shape
    n_subjects, Cw, D = weights.shape
    assert Cw == C, (Cw, C)
    out_dtype = x.dtype
    subjects = subjects.astype(jnp.int32)

    # Optional reduced-precision streaming path (bf16 on v6e/v7x halves DMA
    # bytes and feeds the 256-wide bf16 MXU); accumulation stays f32 in-kernel.
    if compute_dtype is not None:
        x = x.astype(compute_dtype)
        weights = weights.astype(compute_dtype)

    # Lane-dense padding (last dims -> multiples of 128) and sublane-aligned
    # time tiles. Zero padding on the contracted C axis is exact; padded D
    # columns are sliced off below.
    Cp = _round_up(C, 128)
    Dp = _round_up(D, 128)
    tT = min(t_tile, _round_up(T, 8))
    Tp = _round_up(T, tT)

    if (Tp, Cp) != (T, C):
        x = jnp.pad(x, ((0, 0), (0, Tp - T), (0, Cp - C)))
    if (Cp, Dp) != (C, D):
        weights = jnp.pad(weights, ((0, 0), (0, Cp - C), (0, Dp - D)))

    grid = (B, Tp // tT)

    grid_spec = pltpu.PrefetchScalarGridSpec(
        num_scalar_prefetch=1,
        grid=grid,
        in_specs=[
            # x time-tile for (b, t); leading dim squeezed -> kernel sees (tT, Cp).
            pl.BlockSpec((None, tT, Cp), lambda b, t, subj: (b, t, 0)),
            # Weight tile gathered by the prefetched subject id; independent of
            # t, so it is DMA'd once per batch and stays resident across tiles.
            pl.BlockSpec((None, Cp, Dp), lambda b, t, subj: (subj[b], 0, 0)),
        ],
        out_specs=pl.BlockSpec((None, tT, Dp), lambda b, t, subj: (b, t, 0)),
    )

    x_bytes = jnp.dtype(x.dtype).itemsize
    w_bytes = jnp.dtype(weights.dtype).itemsize
    o_bytes = jnp.dtype(out_dtype).itemsize
    # Double-buffered x/out tiles + double-buffered weight tile.
    tile_bytes = (2 * tT * Cp * x_bytes
                  + 2 * tT * Dp * o_bytes
                  + 2 * Cp * Dp * w_bytes)
    # Explicit VMEM budget with headroom, capped at v7x's 64 MiB physical VMEM.
    vmem_limit = int(min(max(2 * tile_bytes, 32 * 1024 * 1024),
                         64 * 1024 * 1024))

    cost = pl.CostEstimate(
        flops=2 * B * Tp * Cp * Dp,
        transcendentals=0,
        bytes_accessed=(B * Tp * Cp * x_bytes
                        + B * Cp * Dp * w_bytes
                        + B * Tp * Dp * o_bytes),
    )

    out = pl.pallas_call(
        _subject_layers_kernel,
        out_shape=jax.ShapeDtypeStruct((B, Tp, Dp), out_dtype),
        grid_spec=grid_spec,
        compiler_params=pltpu.CompilerParams(
            # No grid-level reduction exists, so both axes can be sharded
            # across TensorCores (helps v7x; neutral on v5e/v6e).
            dimension_semantics=("parallel", "parallel"),
            vmem_limit_bytes=vmem_limit,
        ),
        cost_estimate=cost,
    )(subjects, x, weights)

    if (Tp, Dp) != (T, D):
        out = out[:, :T, :D]
    return out


def init_subject_layers_weights(key, in_channels, out_channels, n_subjects,
                                init_id=False):
    """Mirror of SubjectLayers.__init__ (deterministic, no checkpoint load)."""
    w = jax.random.normal(key, (n_subjects, in_channels, out_channels),
                          dtype=jnp.float32)
    if init_id:
        assert in_channels == out_channels
        w = jnp.broadcast_to(jnp.eye(in_channels, dtype=jnp.float32)[None],
                             (n_subjects, in_channels, out_channels))
    w = w * (1.0 / math.sqrt(in_channels))
    return w


if __name__ == "__main__":
    key = jax.random.PRNGKey(0)
    k_w, k_x, k_s = jax.random.split(key, 3)

    B, T = 2, 16
    C_in, C_out = 8, 8
    n_subjects = 4

    weights = init_subject_layers_weights(k_w, C_in, C_out, n_subjects)
    x = jax.random.normal(k_x, (B, T, C_in), dtype=jnp.float32)
    subjects = jax.random.randint(k_s, (B,), 0, n_subjects, dtype=jnp.int32)

    out = subject_layers(x, subjects, weights)
    out = jax.block_until_ready(out)

    # Pure-JAX reference: out[b,t,d] = sum_c x[b,t,c] * W[subjects[b],c,d]
    ref = jnp.einsum("btc,bcd->btd", x, weights[subjects])
    assert out.shape == (B, T, C_out), out.shape
    assert jnp.allclose(out, ref, atol=1e-5, rtol=1e-5)

    # TODO(synk): for large B with few subjects, a grouped (sort-by-subject)
    # matmul would DMA each weight once per subject instead of once per batch.

    print("KERNEL_OK")
</pallas_src>

<mosaic_0001>
module attributes {stable_mosaic.version = 11 : i64} {
  func.func @_subject_layers_kernel(%arg0: i32, %arg1: i32, %arg2: memref<2xi32, #tpu.memory_space<smem>>, %arg3: memref<1x16x128xf32, #tpu.memory_space<vmem>>, %arg4: memref<1x128x128xf32, #tpu.memory_space<vmem>>, %arg5: memref<1x16x128xf32, #tpu.memory_space<vmem>>) attributes {dimension_semantics = [#tpu.dimension_semantics<parallel>, #tpu.dimension_semantics<parallel>], iteration_bounds = array<i64: 2, 1>, scalar_prefetch = 1 : i64, scratch_operands = 0 : i64, tpu.core_type = #tpu.core_type<tc>, window_params = [{transform_indices = @transform_0, window_bounds = array<i64: 1, 16, 128>}, {transform_indices = @transform_1, window_bounds = array<i64: 1, 128, 128>}, {transform_indices = @transform_2, window_bounds = array<i64: 1, 16, 128>}]} {
    %c0 = arith.constant 0 : index
    %c0_0 = arith.constant 0 : index
    %c0_1 = arith.constant 0 : index
    %0 = vector.load %arg3[%c0, %c0_0, %c0_1] : memref<1x16x128xf32, #tpu.memory_space<vmem>>, vector<1x16x128xf32>
    %1 = vector.shape_cast %0 : vector<1x16x128xf32> to vector<16x128xf32>
    %c0_2 = arith.constant 0 : index
    %c0_3 = arith.constant 0 : index
    %c0_4 = arith.constant 0 : index
    %2 = vector.load %arg4[%c0_2, %c0_3, %c0_4] : memref<1x128x128xf32, #tpu.memory_space<vmem>>, vector<1x128x128xf32>
    %3 = vector.shape_cast %2 : vector<1x128x128xf32> to vector<128x128xf32>
    %cst = arith.constant dense<0.000000e+00> : vector<16x128xf32>
    %4 = tpu.matmul %1, %3, %cst {dimension_numbers = #tpu.dot_dimension_numbers<[1], [0], [0], [1], [0, 0, 1, 1], [], []>} : vector<16x128xf32>, vector<128x128xf32>, vector<16x128xf32> -> vector<16x128xf32>
    %c0_5 = arith.constant 0 : index
    %c0_6 = arith.constant 0 : index
    %c0_7 = arith.constant 0 : index
    %5 = vector.load %arg5[%c0_5, %c0_6, %c0_7] : memref<1x16x128xf32, #tpu.memory_space<vmem>>, vector<1x16x128xf32>
    %6 = vector.shape_cast %5 : vector<1x16x128xf32> to vector<16x128xf32>
    %7 = vector.shape_cast %4 : vector<16x128xf32> to vector<1x16x128xf32>
    tpu.vector_store %arg5[%c0_5, %c0_6, %c0_7], %7 {strides = array<i32>} : memref<1x16x128xf32, #tpu.memory_space<vmem>>, vector<1x16x128xf32>,
    return
  }
  func.func @transform_0(%arg0: i32, %arg1: i32, %arg2: memref<2xi32, #tpu.memory_space<smem>>) -> (i32, i32, i32) {
    %c0_i32 = arith.constant 0 : i32
    %c0_i32_0 = arith.constant 0 : i32
    return %arg0, %arg1, %c0_i32 : i32, i32, i32
  }
  func.func @transform_1(%arg0: i32, %arg1: i32, %arg2: memref<2xi32, #tpu.memory_space<smem>>) -> (i32, i32, i32) {
    %0 = arith.index_cast %arg0 : i32 to index
    %1 = memref.load %arg2[%0] : memref<2xi32, #tpu.memory_space<smem>>
    %c0_i32 = arith.constant 0 : i32
    %c0_i32_0 = arith.constant 0 : i32
    %c0_i32_1 = arith.constant 0 : i32
    return %1, %c0_i32, %c0_i32_0 : i32, i32, i32
  }
  func.func @transform_2(%arg0: i32, %arg1: i32, %arg2: memref<2xi32, #tpu.memory_space<smem>>) -> (i32, i32, i32) {
    %c0_i32 = arith.constant 0 : i32
    %c0_i32_0 = arith.constant 0 : i32
    return %arg0, %arg1, %c0_i32 : i32, i32, i32
  }
}

</mosaic_0001>

<llo_original>
// kernel: tpu_custom_call.1
$region0: #{tpu_custom_call.1}
  #allocation0 [shape = 'u32[]', space=smem, size = 0x4, offset = 0x4, fixed_abs, tag = 'smem constant byte address 0x4 - core index']
  #allocation1 [shape = 'u32[144,128]{1,0:T(1,128)}', space=vmem, size = 0x12000, scoped, tag = 'internal scratch']
  #allocation2 [shape = 's32[1]{0}', space=sflag, size = 0x4, scoped, tag = 'scoped memory for tpu_custom_call.1']
  #allocation3 [shape = 'u8[512]{0}', space=smem, size = 0x200, scoped, tag = 'prefetched SMEM operand 0']
  %s0 = inlined_call_operand.hbm [shape: s32[2], index: 0, kind: input, shape index: {}]
  %s1 = inlined_call_operand.hbm [shape: f32[2,16,128], index: 1, kind: input, shape index: {}]
  %s2 = inlined_call_operand.hbm [shape: f32[4,128,128], index: 2, kind: input, shape index: {}]
  %s3 = inlined_call_operand.hbm [shape: f32[2,16,128], index: 3, kind: output, shape index: {}]
  %s4 = sld [smem:[#allocation0]]
  $region49: #{tpu_custom_call.1} parent=0
    _
  %s6 = ssub.s32 1, %s4
  %s7 = scalar_select 0, %s6, %s4
  %9 = dma.hbm_to_smem %s0, 16, [#allocation3], [#allocation2]
  %10 = dma.done [#allocation2], 16
  %11 = sfence
  $region1: #{tpu_custom_call.1} parent=0
    #allocation4 [shape = 'u8[16384]{0}', space=vmem, size = 0x4000, scoped, tag = 'input window, operand 1']
    #allocation5 [shape = 's32[2]{0}', space=sflag, size = 0x8, scoped, tag = 'scoped memory for tpu_custom_call.1']
    #allocation6 [shape = 's32[2]{0}', space=sflag, size = 0x8, scoped, tag = 'scoped memory for tpu_custom_call.1']
    #allocation7 [shape = 'u8[131072]{0}', space=vmem, size = 0x20000, scoped, tag = 'input window, operand 2']
    #allocation8 [shape = 's32[2]{0}', space=sflag, size = 0x8, scoped, tag = 'scoped memory for tpu_custom_call.1']
    #allocation9 [shape = 'u8[16384]{0}', space=vmem, size = 0x4000, scoped, tag = 'output window, operand 0']
    %12 = vsyncpa [#allocation5], 0
    %s13 = scalar_lea.sflag [#allocation5], 1
    %14 = vsyncpa %s13, 0
    %15 = vsyncpa [#allocation8], 0
    %s16 = scalar_lea.sflag [#allocation8], 1
    %17 = vsyncpa %s16, 0
    %18 = vsyncpa [#allocation6], 0
    %s19 = scalar_lea.sflag [#allocation6], 1
    %20 = vsyncpa %s19, 0
    loop: start=0, step=1, limit=4
    $region2: #{tpu_custom_call.1} parent=1 // loop_pre_header
      _
    $region3: #{tpu_custom_call.1} parent=1 // loop_header
      %s22 = sphi 0, %s26
      %p23 = scmp.ge.s32.totalorder %s22, 4
      %s29 = sphi 0, %s41
      %s30 = sphi 0, %s37
      %s31 = sphi 0, %s29
      %s32 = sphi 0, %s30
      %s33 = sphi 0, %s31
      %s34 = sphi 0, %s32
      %s46 = sphi 0, %s48
      %s49 = sphi 0, %s46
      %s50 = sphi 0, %s49
      %s66 = sphi 0, %s50
      %s74 = sphi 0, %s76
      %s77 = sphi 0, %s74
      %s78 = sphi 0, %s77
      %s94 = sphi 0, %s78
      %s102 = sphi 0, %s104
      %s105 = sphi 0, %s102
      %s106 = sphi 0, %s105
      %s122 = sphi 0, %s106
    $region4: #{tpu_custom_call.1} parent=1 // loop_header_branch
      %25 = sbr.rel (%p23) target = $region8
    $region5: #{tpu_custom_call.1} parent=1 // loop_body
      %s27 = ssub.s32 %s22, 1
      %s28 = ssub.s32 %s22, 2
      %s35 = sadd.s32 1, %s30
      %p36 = scmp.ge.s32.totalorder %s35, 1
      %s37 = scalar_select %p36, 0, %s35
      %s38 = sadd.s32 1, %s29
      %s39 = scalar_select %p36, %s38, %s29
      %p40 = scmp.ge.s32.totalorder %s39, 2
      %s41 = scalar_select %p40, 0, %s39
      %s42 = ssub.s32 %s29, %s41
      %s43 = ssub.s32 %s30, %s37
      %s44 = sor.u32 %s42, %s43
      %p45 = scmp.eq.s32.totalorder %s44, 0
      %s47 = sadd.s32 %s46, 1
      %s48 = scalar_select %p45, %s46, %s47
      %p51 = pneg %p45
      %p52 = scmp.eq.s32.totalorder %s22, 1
      %p53 = por %p51, %p52
      %p54 = scmp.ne.s32.totalorder %s46, %s49
      %p55 = scmp.eq.s32.totalorder %s22, 0
      %p56 = por %p54, %p55
      %p57 = scmp.ne.s32.totalorder %s46, %s49
      %p58 = scmp.eq.s32.totalorder %s27, 1
      %p59 = por %p57, %p58
      %p60 = scmp.ne.s32.totalorder %s49, %s50
      %p61 = scmp.eq.s32.totalorder %s27, 0
      %p62 = por %p60, %p61
      %p63 = scmp.ne.s32.totalorder %s49, %s50
      %p64 = scmp.eq.s32.totalorder %s28, 1
      %p65 = por %p63, %p64
      %p67 = scmp.ne.s32.totalorder %s50, %s66
      %p68 = scmp.eq.s32.totalorder %s28, 0
      %p69 = por %p67, %p68
      %s70 = sld [smem:[#allocation3 + %s29]]
      %s71 = sld [smem:[#allocation3 + %s41]]
      %s72 = ssub.s32 %s70, %s71
      %p73 = scmp.eq.s32.totalorder %s72, 0
      %s75 = sadd.s32 %s74, 1
      %s76 = scalar_select %p73, %s74, %s75
      %p79 = pneg %p73
      %p80 = scmp.eq.s32.totalorder %s22, 1
      %p81 = por %p79, %p80
      %p82 = scmp.ne.s32.totalorder %s74, %s77
      %p83 = scmp.eq.s32.totalorder %s22, 0
      %p84 = por %p82, %p83
      %p85 = scmp.ne.s32.totalorder %s74, %s77
      %p86 = scmp.eq.s32.totalorder %s27, 1
      %p87 = por %p85, %p86
      %p88 = scmp.ne.s32.totalorder %s77, %s78
      %p89 = scmp.eq.s32.totalorder %s27, 0
      %p90 = por %p88, %p89
      %p91 = scmp.ne.s32.totalorder %s77, %s78
      %p92 = scmp.eq.s32.totalorder %s28, 1
      %p93 = por %p91, %p92
      %p95 = scmp.ne.s32.totalorder %s78, %s94
      %p96 = scmp.eq.s32.totalorder %s28, 0
      %p97 = por %p95, %p96
      %s98 = ssub.s32 %s29, %s41
      %s99 = ssub.s32 %s30, %s37
      %s100 = sor.u32 %s98, %s99
      %p101 = scmp.eq.s32.totalorder %s100, 0
      %s103 = sadd.s32 %s102, 1
      %s104 = scalar_select %p101, %s102, %s103
      %p107 = pneg %p101
      %p108 = scmp.eq.s32.totalorder %s22, 1
      %p109 = por %p107, %p108
      %p110 = scmp.ne.s32.totalorder %s102, %s105
      %p111 = scmp.eq.s32.totalorder %s22, 0
      %p112 = por %p110, %p111
      %p113 = scmp.ne.s32.totalorder %s102, %s105
      %p114 = scmp.eq.s32.totalorder %s27, 1
      %p115 = por %p113, %p114
      %p116 = scmp.ne.s32.totalorder %s105, %s106
      %p117 = scmp.eq.s32.totalorder %s27, 0
      %p118 = por %p116, %p117
      %p119 = scmp.ne.s32.totalorder %s105, %s106
      %p120 = scmp.eq.s32.totalorder %s28, 1
      %p121 = por %p119, %p120
      %p123 = scmp.ne.s32.totalorder %s106, %s122
      %p124 = scmp.eq.s32.totalorder %s28, 0
      %p125 = por %p123, %p124
      %p126 = scmp.le.s32.totalorder 1, %s22
      %p127 = scmp.lt.s32.totalorder %s22, 3
      %p128 = pnand %p126, %p127
      %p129 = pneg %p128
      // Predicated region
      $region9: #{tpu_custom_call.1} parent=5 // pred_check
        _
      $region10: #{tpu_custom_call.1} parent=5 // pred_check_branch
        %131 = sbr.rel (%p128) target = $region12
      $region11: #{tpu_custom_call.1} parent=5 // pred_region
        %s132 = ssub.s32 %s22, 1
      $region12: #{tpu_custom_call.1} parent=5 // pred_fallthru
        _
      %p133 = scmp.lt.s32.totalorder %s22, 2
      // Predicated region
      $region13: #{tpu_custom_call.1} parent=5 // pred_check
        %p134 = pneg %p133
      $region14: #{tpu_custom_call.1} parent=5 // pred_check_branch
        %136 = sbr.rel (%p134) target = $region16
      $region15: #{tpu_custom_call.1} parent=5 // pred_region
        // Predicated region
        $region17: #{tpu_custom_call.1} parent=15 // pred_check
          %p137 = pneg %p56
        $region18: #{tpu_custom_call.1} parent=15 // pred_check_branch
          %139 = sbr.rel (%p137) target = $region20
        $region19: #{tpu_custom_call.1} parent=15 // pred_region
          %s140 = sand.u32 %s46, 1
          %s141 = scalar_lea.sflag [#allocation5], %s140
          %s142 = sand.u32 %s46, 1
          %s143 = smul.addr %s142, 16
          %s144 = scalar_lea.vmem [#allocation4], %s143
          %s145 = smul.u32 2, %s30
          %s147 = ssub.s32 256, 256
          %148 = vsyncadd %s141, %s147
          %s149 = smul.addr %s29, 2
          %s150 = sadd.s32 %s145, %s149
          %s151 = smul.addr %s150, 128
          %s152 = scalar_lea.hbm %s1, %s151
          %s153 = sshll.u32 %s144, 4
          %s154 = int_to_ptr.vmem [resolvable:$true] %s153
          %159 = dma.hbm_to_vmem [thread:$0]  %s152, 256, %s154, %s141, 128, 128, 8
        $region20: #{tpu_custom_call.1} parent=15 // pred_fallthru
          _
        // Predicated region
        $region21: #{tpu_custom_call.1} parent=15 // pred_check
          %p160 = pneg %p84
        $region22: #{tpu_custom_call.1} parent=15 // pred_check_branch
          %162 = sbr.rel (%p160) target = $region24
        $region23: #{tpu_custom_call.1} parent=15 // pred_region
          %s163 = sand.u32 %s74, 1
          %s164 = scalar_lea.sflag [#allocation8], %s163
          %s165 = sand.u32 %s74, 1
          %s166 = smul.addr %s165, 128
          %s167 = scalar_lea.vmem [#allocation7], %s166
          %s168 = sld [smem:[#allocation3 + %s29]]
          %s170 = ssub.s32 2048, 2048
          %171 = vsyncadd %s164, %s170
          %s172 = smul.addr %s168, 16
          %s173 = smul.addr %s172, 128
          %s174 = scalar_lea.hbm %s2, %s173
          %s175 = sshll.u32 %s167, 4
          %s176 = int_to_ptr.vmem [resolvable:$true] %s175
          %181 = dma.hbm_to_vmem [thread:$0]  %s174, 2048, %s176, %s164, 128, 128, 8
        $region24: #{tpu_custom_call.1} parent=15 // pred_fallthru
          _
      $region16: #{tpu_custom_call.1} parent=5 // pred_fallthru
        _
      %p182 = scmp.le.s32.totalorder 1, %s22
      %p183 = scmp.lt.s32.totalorder %s22, 3
      %p184 = pnand %p182, %p183
      %p185 = pneg %p184
      // Predicated region
      $region25: #{tpu_custom_call.1} parent=5 // pred_check
        _
      $region26: #{tpu_custom_call.1} parent=5 // pred_check_branch
        %187 = sbr.rel (%p184) target = $region28
      $region27: #{tpu_custom_call.1} parent=5 // pred_region
        %s188 = ssub.s32 %s22, 1
        %s189 = sand.u32 %s49, 1
        %s190 = scalar_lea.sflag [#allocation5], %s189
        %s191 = sand.u32 %s49, 1
        %s192 = smul.addr %s191, 16
        %s193 = scalar_lea.vmem [#allocation4], %s192
        // Predicated region
        $region29: #{tpu_custom_call.1} parent=27 // pred_check
          %p194 = pneg %p62
        $region30: #{tpu_custom_call.1} parent=27 // pred_check_branch
          %196 = sbr.rel (%p194) target = $region32
        $region31: #{tpu_custom_call.1} parent=27 // pred_region
          %197 = dma.done %s190, 256
        $region32: #{tpu_custom_call.1} parent=27 // pred_fallthru
          _
        %s198 = sand.u32 %s77, 1
        %s199 = scalar_lea.sflag [#allocation8], %s198
        %s200 = sand.u32 %s77, 1
        %s201 = smul.addr %s200, 128
        %s202 = scalar_lea.vmem [#allocation7], %s201
        // Predicated region
        $region33: #{tpu_custom_call.1} parent=27 // pred_check
          %p203 = pneg %p90
        $region34: #{tpu_custom_call.1} parent=27 // pred_check_branch
          %205 = sbr.rel (%p203) target = $region36
        $region35: #{tpu_custom_call.1} parent=27 // pred_region
          %206 = dma.done %s199, 2048
        $region36: #{tpu_custom_call.1} parent=27 // pred_fallthru
          _
        %s207 = sand.u32 %s49, 1
        %s208 = scalar_lea.sflag [#allocation5], %s207
        %s209 = sand.u32 %s49, 1
        %s210 = smul.addr %s209, 16
        %s211 = scalar_lea.vmem [#allocation4], %s210
        %p212 = pneg %p62
        %p213 = pneg %p59
        %s214 = sand.u32 %s77, 1
        %s215 = scalar_lea.sflag [#allocation8], %s214
        %s216 = sand.u32 %s77, 1
        %s217 = smul.addr %s216, 128
        %s218 = scalar_lea.vmem [#allocation7], %s217
        %p219 = pneg %p90
        %p220 = pneg %p87
        %p221 = pneg %p118
        %p222 = pneg %p115
        %s223 = sand.u32 %s105, 1
        %s224 = scalar_lea.sflag [#allocation6], %s223
        %s225 = sand.u32 %s105, 1
        %s226 = smul.addr %s225, 16
        %s227 = scalar_lea.vmem [#allocation9], %s226
        %s228 = smul.u32 2, %s32
        %s229 = sld [smem:[#allocation3 + %s31]]
        %s230 = smul.u32 2, %s32
        %v231 = vld [vmem:[%s193] sm:$0xff]
        %v232 = vld [vmem:[%s193 + $0x8] sm:$0xff]
        %v233 = vld [vmem:[%s202] sm:$0xff]
        %v234 = vld [vmem:[%s202 + $0x8] sm:$0xff]
        %v235 = vld [vmem:[%s202 + $0x10] sm:$0xff]
        %v236 = vld [vmem:[%s202 + $0x18] sm:$0xff]
        %v237 = vld [vmem:[%s202 + $0x20] sm:$0xff]
        %v238 = vld [vmem:[%s202 + $0x28] sm:$0xff]
        %v239 = vld [vmem:[%s202 + $0x30] sm:$0xff]
        %v240 = vld [vmem:[%s202 + $0x38] sm:$0xff]
        %v241 = vld [vmem:[%s202 + $0x40] sm:$0xff]
        %v242 = vld [vmem:[%s202 + $0x48] sm:$0xff]
        %v243 = vld [vmem:[%s202 + $0x50] sm:$0xff]
        %v244 = vld [vmem:[%s202 + $0x58] sm:$0xff]
        %v245 = vld [vmem:[%s202 + $0x60] sm:$0xff]
        %v246 = vld [vmem:[%s202 + $0x68] sm:$0xff]
        %v247 = vld [vmem:[%s202 + $0x70] sm:$0xff]
        %v248 = vld [vmem:[%s202 + $0x78] sm:$0xff]
        %249 = vmatprep.subr.mxu0 0.0
        %250 = vmatpush1.msra.mxu0 %v233
        %251 = vmatprep.subr.mxu0 0.0
        %252 = vmatpush1.msra.mxu0 %v234
        %253 = vmatprep.subr.mxu0 0.0
        %254 = vmatpush1.msra.mxu0 %v235
        %255 = vmatprep.subr.mxu0 0.0
        %256 = vmatpush1.msra.mxu0 %v236
        %257 = vmatprep.subr.mxu0 0.0
        %258 = vmatpush1.msra.mxu0 %v237
        %259 = vmatprep.subr.mxu0 0.0
        %260 = vmatpush1.msra.mxu0 %v238
        %261 = vmatprep.subr.mxu0 0.0
        %262 = vmatpush1.msra.mxu0 %v239
        %263 = vmatprep.subr.mxu0 0.0
        %264 = vmatpush1.msra.mxu0 %v240
        %265 = vmatprep.subr.mxu0 0.0
        %266 = vmatpush1.msra.mxu0 %v241
        %267 = vmatprep.subr.mxu0 0.0
        %268 = vmatpush1.msra.mxu0 %v242
        %269 = vmatprep.subr.mxu0 0.0
        %270 = vmatpush1.msra.mxu0 %v243
        %271 = vmatprep.subr.mxu0 0.0
        %272 = vmatpush1.msra.mxu0 %v244
        %273 = vmatprep.subr.mxu0 0.0
        %274 = vmatpush1.msra.mxu0 %v245
        %275 = vmatprep.subr.mxu0 0.0
        %276 = vmatpush1.msra.mxu0 %v246
        %277 = vmatprep.subr.mxu0 0.0
        %278 = vmatpush1.msra.mxu0 %v247
        %279 = vmatprep.subr.mxu0 0.0
        %280 = vmatpush1.msra.mxu0 %v248
        %281 = vmatprep.subr.mxu0 0.0
        %282 = vmatpush1.msra.mxu0 0.0
        %283 = vmatprep.subr.mxu0 0.0
        %284 = vmatpush1.msra.mxu0 0.0
        %285 = vmatprep.subr.mxu0 0.0
        %286 = vmatpush1.msra.mxu0 0.0
        %287 = vmatprep.subr.mxu0 0.0
        %288 = vmatpush1.msra.mxu0 0.0
        %289 = vmatprep.subr.mxu0 0.0
        %290 = vmatpush1.msra.mxu0 0.0
        %291 = vmatprep.subr.mxu0 0.0
        %292 = vmatpush1.msra.mxu0 0.0
        %293 = vmatprep.subr.mxu0 0.0
        %294 = vmatpush1.msra.mxu0 0.0
        %295 = vmatprep.subr.mxu0 0.0
        %296 = vmatpush1.msra.mxu0 0.0
        %297 = vmatprep.subr.mxu0 0.0
        %298 = vmatpush1.msra.mxu0 0.0
        %299 = vmatprep.subr.mxu0 0.0
        %300 = vmatpush1.msra.mxu0 0.0
        %301 = vmatprep.subr.mxu0 0.0
        %302 = vmatpush1.msra.mxu0 0.0
        %303 = vmatprep.subr.mxu0 0.0
        %304 = vmatpush1.msra.mxu0 0.0
        %305 = vmatprep.subr.mxu0 0.0
        %306 = vmatpush1.msra.mxu0 0.0
        %307 = vmatprep.subr.mxu0 0.0
        %308 = vmatpush1.msra.mxu0 0.0
        %309 = vmatprep.subr.mxu0 0.0
        %310 = vmatpush1.msra.mxu0 0.0
        %311 = vmatprep.subr.mxu0 0.0
        %312 = vmatpush1.msra.mxu0 0.0
        %313 = vmatprep.mubr.f32.mxu0 0.0
        %314 = vmatmul.mubr.f32.gmra.mrb[0].mxu0 %v231
        %v315 = vpop.f32.mrb[0].mxu0
        %v316 = vadd.f32 0.0, %v315
        %v317 = vpop.f32.mrb[0].mxu0
        %318 = vmatprep.mubr.f32.mxu0 0.0
        %319 = vmatmul.mubr.f32.gmra.mrb[0].mxu0 %v232
        %v320 = vpop.f32.mrb[0].mxu0
        %v321 = vadd.f32 0.0, %v320
        %v322 = vpop.f32.mrb[0].mxu0
        %323 = vdwg.mxu0
        %324 = vst [vmem:[%s227] sm:$0xff] %v316
        %325 = vst [vmem:[%s227 + $0x8] sm:$0xff] %v321
        %s326 = sand.u32 %s105, 1
        %s327 = scalar_lea.sflag [#allocation6], %s326
        %s328 = sand.u32 %s105, 1
        %s329 = smul.addr %s328, 16
        %s330 = scalar_lea.vmem [#allocation9], %s329
        // Predicated region
        $region37: #{tpu_custom_call.1} parent=27 // pred_check
          %p331 = pneg %p115
        $region38: #{tpu_custom_call.1} parent=27 // pred_check_branch
          %333 = sbr.rel (%p331) target = $region40
        $region39: #{tpu_custom_call.1} parent=27 // pred_region
          %s334 = smul.u32 2, %s32
          %s336 = ssub.s32 256, 256
          %337 = vsyncadd %s327, %s336
          %s338 = smul.addr %s31, 2
          %s339 = sadd.s32 %s334, %s338
          %s340 = smul.addr %s339, 128
          %s341 = scalar_lea.hbm %s3, %s340
          %s342 = sshll.u32 %s330, 4
          %s343 = int_to_ptr.vmem [resolvable:$true] %s342
          %348 = dma.vmem_to_hbm [thread:$0]  %s343, 256, %s341, %s327, 128, 128, 8
        $region40: #{tpu_custom_call.1} parent=27 // pred_fallthru
          _
      $region28: #{tpu_custom_call.1} parent=5 // pred_fallthru
        _
      %p349 = scmp.le.s32.totalorder 2, %s22
      // Predicated region
      $region41: #{tpu_custom_call.1} parent=5 // pred_check
        %p350 = pneg %p349
      $region42: #{tpu_custom_call.1} parent=5 // pred_check_branch
        %352 = sbr.rel (%p350) target = $region44
      $region43: #{tpu_custom_call.1} parent=5 // pred_region
        %s353 = ssub.s32 %s22, 2
        // Predicated region
        $region45: #{tpu_custom_call.1} parent=43 // pred_check
          %p354 = pneg %p121
        $region46: #{tpu_custom_call.1} parent=43 // pred_check_branch
          %356 = sbr.rel (%p354) target = $region48
        $region47: #{tpu_custom_call.1} parent=43 // pred_region
          %s357 = sand.u32 %s106, 1
          %s358 = scalar_lea.sflag [#allocation6], %s357
          %s359 = sand.u32 %s106, 1
          %s360 = smul.addr %s359, 16
          %s361 = scalar_lea.vmem [#allocation9], %s360
          %362 = dma.done %s358, 256
        $region48: #{tpu_custom_call.1} parent=43 // pred_fallthru
          _
      $region44: #{tpu_custom_call.1} parent=5 // pred_fallthru
        _
    $region6: #{tpu_custom_call.1} parent=1 // loop_footer
      %s26 = sadd.s32 1, %s22
    $region7: #{tpu_custom_call.1} parent=1 // loop_footer_branch
      %21 = sbr.rel target = $region3
    $region8: #{tpu_custom_call.1} parent=1 // loop_exit
      _
    %363 = vsyncpa [#allocation5], 1
    %s364 = scalar_lea.sflag [#allocation5], 1
    %365 = vsyncpa %s364, 1
    %366 = vsyncpa [#allocation8], 1
    %s367 = scalar_lea.sflag [#allocation8], 1
    %368 = vsyncpa %s367, 1
    %369 = vsyncpa [#allocation6], 1
    %s370 = scalar_lea.sflag [#allocation6], 1
    %371 = vsyncpa %s370, 1

</llo_original>
